<compile_context>
chip_gen: v5e
topology: v5e:2x2
jax: 0.10.0
libtpu: 0.0.40
codegen_flags: <defaults>
</compile_context>

<pallas_src>
import functools

import jax
import jax.numpy as jnp
from jax import lax
from jax.experimental import pallas as pl
from jax.experimental.pallas import tpu as pltpu


# ---------------------------------------------------------------------------
# Helpers
# ---------------------------------------------------------------------------

def _round_up(x, m):
    return (x + m - 1) // m * m


def _gelu_tanh(x):
    # torch 'gelu_pytorch_tanh'
    return 0.5 * x * (1.0 + jnp.tanh(0.7978845608028654 * (x + 0.044715 * x * x * x)))


@functools.lru_cache(maxsize=1)
def _tpu_vmem_capacity():
    """Physical VMEM bytes; conservative 64 MiB (v7x-sized) fallback."""
    try:
        info = pltpu.get_tpu_info()
        for attr in ("vmem_capacity_bytes", "vmem_size_bytes", "vmem_bytes"):
            v = getattr(info, attr, None)
            if v:
                return int(v)
    except Exception:
        pass
    return 64 << 20


def choose_tf(F, tf_max=None):
    """Intermediate-dim tile: 256 on 64-MiB-VMEM chips (v7x), 512 otherwise.
    Falls back to no F-tiling if tf_max does not divide F."""
    if tf_max is None:
        tf_max = 256 if _tpu_vmem_capacity() <= (64 << 20) else 512
    return tf_max if F % tf_max == 0 else F


def _vmem_footprint(tm, tf, H, dsize):
    """Accurate per-step VMEM bytes: double-buffered x/w13/w2/cw/out tiles,
    resident f32 accumulator, and the in-kernel h/inter f32 temporaries."""
    return (2 * tm * H * dsize            # x (double-buffered)
            + 2 * 2 * H * tf * dsize      # fused w13 tile
            + 2 * tf * H * dsize          # w2 tile
            + 2 * tm * 4                  # cw tile (f32)
            + 2 * tm * H * dsize          # output
            + tm * H * 4                  # f32 accumulator scratch
            + tm * 3 * tf * 4)            # h (tm,2tf) + inter (tm,tf) f32 temps


def choose_tm(T, H, tf, dtype, tm=None):
    """Chip-aware token-tile size + VMEM budget."""
    cap = _tpu_vmem_capacity()
    small_vmem = cap <= (64 << 20)                       # v7x-class
    budget = min(cap - (8 << 20), (56 << 20) if small_vmem else (100 << 20))
    dsize = jnp.dtype(dtype).itemsize
    if tm is None:
        tm = 512 if small_vmem else 768
    tm = max(8, min(_round_up(tm, 8), _round_up(T, 8)))
    # v7x megacore: keep >= 2 token tiles so the "parallel" axis spans both TCs.
    if small_vmem and _round_up(T, tm) // tm < 2 and T > 8:
        tm = _round_up((T + 1) // 2, 8)
    while tm > 8 and _vmem_footprint(tm, tf, H, dsize) + (4 << 20) > budget:
        tm = max(8, _round_up(tm // 2, 8))
    return tm, budget


def prepare_moe_params(gate_t, w1t, w3t, w2t, *, tf):
    """Fuse w1/w3 into one (E, H, 2F) tensor, interleaved per F-tile so that
    slice [2*tf*f : 2*tf*(f+1)] == [w1 tile f | w3 tile f]."""
    E, H, F = w1t.shape
    assert F % tf == 0, "tf must divide F (pad F at load time for prod shapes)"
    n_tf = F // tf
    w13t = jnp.concatenate(
        [w1t.reshape(E, H, n_tf, tf), w3t.reshape(E, H, n_tf, tf)], axis=-1
    ).reshape(E, H, 2 * F)
    return {"gate_t": gate_t, "w13t": w13t, "w2t": w2t}


# ---------------------------------------------------------------------------
# Kernel
# ---------------------------------------------------------------------------

def _moe_expert_kernel(act_ref, ee_ref, x_ref, w13_ref, w2_ref, cw_ref, o_ref,
                       acc_ref):
    t = pl.program_id(0)          # token tile
    s = pl.program_id(1)          # expert slot (compacted: active slots first)
    f = pl.program_id(2)          # F tile
    n_s = pl.num_programs(1)
    last_s = n_s - 1
    last_f = pl.num_programs(2) - 1

    @pl.when(jnp.logical_and(s == 0, f == 0))
    def _():
        acc_ref[...] = jnp.zeros_like(acc_ref)

    # Compute only for active slots; inactive slots also had their weight DMA
    # elided by the index_map (they point at the previously fetched block).
    @pl.when(act_ref[t * n_s + s] != 0)
    def _():
        tf = w2_ref.shape[1]
        x = x_ref[...]                                                    # (tm, H)
        # Fused w1/w3 matmul: one MXU pass producing (tm, 2*tf), f32 acc.
        h = jnp.dot(x, w13_ref[0], preferred_element_type=jnp.float32)
        # Fold the combine weight into the intermediate (f32, before the cast):
        # scales tm*tf elements instead of tm*H at the accumulate step.
        inter = (cw_ref[0] * (_gelu_tanh(h[:, :tf]) * h[:, tf:])).astype(x.dtype)
        acc_ref[...] += jnp.dot(inter, w2_ref[0],
                                preferred_element_type=jnp.float32)       # (tm, H)

    @pl.when(jnp.logical_and(s == last_s, f == last_f))
    def _():
        o_ref[...] = acc_ref[...].astype(o_ref.dtype)


# ---------------------------------------------------------------------------
# Pallas wrapper
# ---------------------------------------------------------------------------

def moe_experts(x, w13t, w2t, cw_e, act, ee, *, tm, tf, vmem_budget):
    T, H = x.shape
    E, F, _ = w2t.shape
    assert T % tm == 0 and F % tf == 0
    n_t, n_f = T // tm, F // tf
    dsize = jnp.dtype(x.dtype).itemsize

    vmem_limit = int(max(8 << 20,
                         min(_vmem_footprint(tm, tf, H, dsize) + (4 << 20),
                             vmem_budget)))

    # Data-dependent index maps (scalar-prefetched 1D SMEM tables): inactive
    # (tile, slot) pairs return the block index fetched on the previous grid
    # step (last active expert of this tile at f = n_f-1), so the weight DMA
    # is elided.  Correctness never depends on the elision: the kernel body is
    # gated on act[] so stale/duplicate data is never consumed.
    def x_map(t, s, f, act_ref, ee_ref):
        return (t, 0)

    def w13_map(t, s, f, act_ref, ee_ref):
        a = act_ref[t * E + s]
        return (ee_ref[t * E + s], 0, a * f + (1 - a) * (n_f - 1))

    def w2_map(t, s, f, act_ref, ee_ref):
        a = act_ref[t * E + s]
        return (ee_ref[t * E + s], a * f + (1 - a) * (n_f - 1), 0)

    def cw_map(t, s, f, act_ref, ee_ref):
        return (ee_ref[t * E + s], t, 0)

    def o_map(t, s, f, act_ref, ee_ref):
        return (t, 0)

    return pl.pallas_call(
        _moe_expert_kernel,
        out_shape=jax.ShapeDtypeStruct((T, H), x.dtype),
        grid_spec=pltpu.PrefetchScalarGridSpec(
            num_scalar_prefetch=2,                       # act, ee -> SMEM (1D)
            grid=(n_t, E, n_f),
            in_specs=[
                pl.BlockSpec((tm, H), x_map),
                pl.BlockSpec((1, H, 2 * tf), w13_map),
                pl.BlockSpec((1, tf, H), w2_map),
                pl.BlockSpec((1, tm, 1), cw_map),
            ],
            out_specs=pl.BlockSpec((tm, H), o_map),
            scratch_shapes=[pltpu.VMEM((tm, H), jnp.float32)],
        ),
        compiler_params=pltpu.CompilerParams(
            dimension_semantics=("parallel", "arbitrary", "arbitrary"),
            vmem_limit_bytes=vmem_limit,
        ),
    )(act, ee, x, w13t, w2t, cw_e)


# ---------------------------------------------------------------------------
# Module forward (routing glue in JAX, expert MLPs in Pallas)
# ---------------------------------------------------------------------------

def gemmoe_sparse_moe_block(hidden_states, params, *, top_k, has_share_expert,
                            tf, tm=None):
    B, S, H = hidden_states.shape
    x = hidden_states.reshape(-1, H)
    T = x.shape[0]
    gate_t = params["gate_t"]
    E = gate_t.shape[1]
    F = params["w2t"].shape[1]

    # Router: tiny (T,H)x(H,E) matmul with lane-sparse output -> leave to XLA.
    router_logits = jnp.dot(x, gate_t, preferred_element_type=jnp.float32)
    routing_weights = jax.nn.softmax(router_logits, axis=1)

    if has_share_expert:
        topk_w_left, topk_i_left = lax.top_k(routing_weights[:, 1:], top_k - 1)
        topk_i_left = topk_i_left + 1
        topk_weight = jnp.concatenate([routing_weights[:, 0:1], topk_w_left], axis=1)
        topk_idx = jnp.concatenate(
            [jnp.zeros((T, 1), dtype=topk_i_left.dtype), topk_i_left], axis=1)
    else:
        topk_weight, topk_idx = lax.top_k(routing_weights, top_k)
    topk_weight = topk_weight / jnp.sum(topk_weight, axis=-1, keepdims=True)

    # Dense per-(token, expert) combine weight, kept in f32 (exact: top-k
    # indices of one token are unique).
    cw = jnp.sum(jax.nn.one_hot(topk_idx, E, dtype=jnp.float32)
                 * topk_weight[..., None].astype(jnp.float32), axis=1)      # (T, E)

    # Tile sizing + zero padding for the ragged last token tile.
    if F % tf != 0:
        tf = F                       # safety; normally caller used choose_tf(F)
    tm, vmem_budget = choose_tm(T, H, tf, x.dtype, tm=tm)
    T_pad = _round_up(T, tm)
    n_t = T_pad // tm

    x_pad = jnp.pad(x, ((0, T_pad - T), (0, 0)))
    cw_pad = jnp.pad(cw, ((0, T_pad - T), (0, 0)))
    cw_e = cw_pad.T.reshape(E, T_pad, 1)                   # per-expert cw blocks

    # Active-slot compaction tables (flattened 1D int32 to avoid SMEM 2D lane
    # padding): slot s of tile t works on expert ee[t*E+s]; the first nact[t]
    # slots hold the tile's active experts in ascending id order, the rest
    # repeat the last active expert (block index unchanged -> DMA elided) and
    # are compute-gated via act[t*E+s]==0.
    active = jnp.any(cw_pad.reshape(n_t, tm, E) != 0.0, axis=1)             # (n_t, E)
    nact = jnp.sum(active, axis=1).astype(jnp.int32)                        # (n_t,)
    slot_ids = jnp.arange(E, dtype=jnp.int32)[None, :]
    order = jnp.argsort(jnp.where(active, slot_ids, slot_ids + E),
                        axis=1).astype(jnp.int32)                           # (n_t, E)
    last_active = jnp.take_along_axis(order,
                                      jnp.maximum(nact - 1, 0)[:, None], axis=1)
    act_slots = slot_ids < nact[:, None]
    ee = jnp.where(act_slots, order, last_active).astype(jnp.int32).reshape(-1)
    act = act_slots.astype(jnp.int32).reshape(-1)

    y = moe_experts(x_pad, params["w13t"], params["w2t"], cw_e, act, ee,
                    tm=tm, tf=tf, vmem_budget=vmem_budget)[:T]

    final = y.reshape(B, S, H).astype(hidden_states.dtype)
    return final, router_logits.astype(hidden_states.dtype)


# ---------------------------------------------------------------------------
# Pure-JAX reference (mirrors PyTorch semantics) for a correctness check
# ---------------------------------------------------------------------------

def reference_block(hidden_states, params, *, top_k, has_share_expert):
    B, S, H = hidden_states.shape
    x = hidden_states.reshape(-1, H)
    T = x.shape[0]
    E = params["gate_t"].shape[1]

    router_logits = x @ params["gate_t"]
    routing_weights = jax.nn.softmax(router_logits, axis=1)
    if has_share_expert:
        topk_w_left, topk_i_left = lax.top_k(routing_weights[:, 1:], top_k - 1)
        topk_i_left = topk_i_left + 1
        topk_weight = jnp.concatenate([routing_weights[:, 0:1], topk_w_left], axis=1)
        topk_idx = jnp.concatenate(
            [jnp.zeros((T, 1), dtype=topk_i_left.dtype), topk_i_left], axis=1)
    else:
        topk_weight, topk_idx = lax.top_k(routing_weights, top_k)
    topk_weight = topk_weight / jnp.sum(topk_weight, axis=-1, keepdims=True)

    expert_outs = []
    for e in range(E):
        h1 = x @ params["w1t"][e]
        h3 = x @ params["w3t"][e]
        expert_outs.append((_gelu_tanh(h1) * h3) @ params["w2t"][e])
    expert_outs = jnp.stack(expert_outs, axis=0)                         # (E, T, H)

    gathered = jnp.take_along_axis(
        expert_outs.transpose(1, 0, 2),                                  # (T, E, H)
        topk_idx[..., None], axis=1)                                     # (T, K, H)
    y = jnp.sum(gathered * topk_weight[..., None], axis=1)
    return y.reshape(B, S, H), router_logits


# ---------------------------------------------------------------------------
# Main
# ---------------------------------------------------------------------------

if __name__ == "__main__":
    # Small config: hidden=32, intermediate=64, 4 local experts, top_k=2,
    # share expert enabled.
    B, S, H, F, E, TOP_K = 2, 8, 32, 64, 4, 2
    HAS_SHARE_EXPERT = True

    key = jax.random.PRNGKey(0)
    kx, kg, k1, k2, k3 = jax.random.split(key, 5)

    gate_t = jax.random.normal(kg, (H, E), jnp.float32) * 0.05
    w1t = jax.random.normal(k1, (E, H, F), jnp.float32) * 0.05
    w3t = jax.random.normal(k2, (E, H, F), jnp.float32) * 0.05
    w2t = jax.random.normal(k3, (E, F, H), jnp.float32) * 0.05
    hidden_states = jax.random.normal(kx, (B, S, H), jnp.float32)

    tf = choose_tf(F)                          # toy F=64 -> no F-tiling
    params_f32 = prepare_moe_params(gate_t, w1t, w3t, w2t, tf=tf)
    raw_params = {"gate_t": gate_t, "w1t": w1t, "w3t": w3t, "w2t": w2t}

    # tm=8 -> two token tiles on the parallel grid axis for the toy T=16
    # (also exercises per-tile DMA-elided expert skip).
    fwd = jax.jit(functools.partial(
        gemmoe_sparse_moe_block, top_k=TOP_K, has_share_expert=HAS_SHARE_EXPERT,
        tm=8, tf=tf))

    out, logits = fwd(hidden_states, params_f32)
    jax.block_until_ready((out, logits))

    ref_out, ref_logits = reference_block(
        hidden_states, raw_params, top_k=TOP_K, has_share_expert=HAS_SHARE_EXPERT)

    assert out.shape == (B, S, H) and logits.shape == (B * S, E)
    assert jnp.allclose(out, ref_out, atol=2e-4, rtol=2e-4), "expert output mismatch"
    assert jnp.allclose(logits, ref_logits, atol=2e-4, rtol=2e-4), "router logits mismatch"

    # bf16 path (production dtype: full-rate MXU + halved weight DMA). Same
    # kernel; loose sanity check only, since bf16 quantization can flip
    # near-tied top-k choices.
    to_bf16 = lambda a: a.astype(jnp.bfloat16)
    params_bf16 = prepare_moe_params(to_bf16(gate_t), to_bf16(w1t), to_bf16(w3t),
                                     to_bf16(w2t), tf=tf)
    fwd_bf16 = jax.jit(functools.partial(
        gemmoe_sparse_moe_block, top_k=TOP_K, has_share_expert=HAS_SHARE_EXPERT,
        tm=8, tf=tf))
    out_bf16, _ = fwd_bf16(to_bf16(hidden_states), params_bf16)
    jax.block_until_ready(out_bf16)
    assert out_bf16.shape == (B, S, H) and out_bf16.dtype == jnp.bfloat16
    assert bool(jnp.isfinite(out_bf16.astype(jnp.float32)).all())
    assert float(jnp.max(jnp.abs(out_bf16.astype(jnp.float32) - ref_out))) < 0.25

    print("KERNEL_OK")
</pallas_src>

<mosaic_0001>
module attributes {stable_mosaic.version = 11 : i64} {
  func.func @_moe_expert_kernel(%arg0: i32, %arg1: i32, %arg2: i32, %arg3: memref<8xi32, #tpu.memory_space<smem>>, %arg4: memref<8xi32, #tpu.memory_space<smem>>, %arg5: memref<8x32xf32, #tpu.memory_space<vmem>>, %arg6: memref<1x32x128xf32, #tpu.memory_space<vmem>>, %arg7: memref<1x64x32xf32, #tpu.memory_space<vmem>>, %arg8: memref<1x8x1xf32, #tpu.memory_space<vmem>>, %arg9: memref<8x32xf32, #tpu.memory_space<vmem>>, %arg10: memref<8x32xf32, #tpu.memory_space<vmem>>) attributes {dimension_semantics = [#tpu.dimension_semantics<parallel>, #tpu.dimension_semantics<arbitrary>, #tpu.dimension_semantics<arbitrary>], iteration_bounds = array<i64: 2, 4, 1>, scalar_prefetch = 2 : i64, scratch_operands = 1 : i64, tpu.core_type = #tpu.core_type<tc>, window_params = [{transform_indices = @transform_0, window_bounds = array<i64: 8, 32>}, {transform_indices = @transform_1, window_bounds = array<i64: 1, 32, 128>}, {transform_indices = @transform_2, window_bounds = array<i64: 1, 64, 32>}, {transform_indices = @transform_3, window_bounds = array<i64: 1, 8, 1>}, {transform_indices = @transform_4, window_bounds = array<i64: 8, 32>}]} {
    %c0_i32 = arith.constant 0 : i32
    %0 = arith.cmpi eq, %arg1, %c0_i32 : i32
    %c0_i32_0 = arith.constant 0 : i32
    %1 = arith.cmpi eq, %arg2, %c0_i32_0 : i32
    %2 = arith.andi %0, %1 : i1
    %3 = arith.extui %2 : i1 to i32
    %c0_i32_1 = arith.constant 0 : i32
    %4 = arith.cmpi ne, %3, %c0_i32_1 : i32
    scf.if %4 {
      %cst = arith.constant 0.000000e+00 : f32
      %17 = vector.broadcast %cst : f32 to vector<8x32xf32>
      %c0 = arith.constant 0 : index
      %c0_6 = arith.constant 0 : index
      %18 = vector.load %arg10[%c0, %c0_6] : memref<8x32xf32, #tpu.memory_space<vmem>>, vector<8x32xf32>
      tpu.vector_store %arg10[%c0, %c0_6], %17 {strides = array<i32>} : memref<8x32xf32, #tpu.memory_space<vmem>>, vector<8x32xf32>,
    } else {
    }
    %c4_i32 = arith.constant 4 : i32
    %5 = arith.muli %arg0, %c4_i32 : i32
    %6 = arith.addi %5, %arg1 : i32
    %7 = arith.index_cast %6 : i32 to index
    %8 = memref.load %arg3[%7] : memref<8xi32, #tpu.memory_space<smem>>
    %c0_i32_2 = arith.constant 0 : i32
    %9 = arith.cmpi ne, %8, %c0_i32_2 : i32
    %10 = arith.extui %9 : i1 to i32
    %c0_i32_3 = arith.constant 0 : i32
    %11 = arith.cmpi ne, %10, %c0_i32_3 : i32
    scf.if %11 {
      %c0 = arith.constant 0 : index
      %c0_6 = arith.constant 0 : index
      %17 = vector.load %arg5[%c0, %c0_6] : memref<8x32xf32, #tpu.memory_space<vmem>>, vector<8x32xf32>
      %c0_7 = arith.constant 0 : index
      %c0_8 = arith.constant 0 : index
      %c0_9 = arith.constant 0 : index
      %18 = vector.load %arg6[%c0_7, %c0_8, %c0_9] : memref<1x32x128xf32, #tpu.memory_space<vmem>>, vector<1x32x128xf32>
      %19 = vector.shape_cast %18 : vector<1x32x128xf32> to vector<32x128xf32>
      %cst = arith.constant dense<0.000000e+00> : vector<8x128xf32>
      %20 = tpu.matmul %17, %19, %cst {dimension_numbers = #tpu.dot_dimension_numbers<[1], [0], [0], [1], [0, 0, 1, 1], [], []>} : vector<8x32xf32>, vector<32x128xf32>, vector<8x128xf32> -> vector<8x128xf32>
      %c0_10 = arith.constant 0 : index
      %c0_11 = arith.constant 0 : index
      %c0_12 = arith.constant 0 : index
      %21 = vector.load %arg8[%c0_10, %c0_11, %c0_12] : memref<1x8x1xf32, #tpu.memory_space<vmem>>, vector<1x8x1xf32>
      %22 = vector.shape_cast %21 : vector<1x8x1xf32> to vector<8x1xf32>
      %23 = vector.extract_strided_slice %20 {offsets = [0, 0], sizes = [8, 64], strides = [1, 1]} : vector<8x128xf32> to vector<8x64xf32>
      %cst_13 = arith.constant 5.000000e-01 : f32
      %24 = vector.broadcast %cst_13 : f32 to vector<8x64xf32>
      %25 = arith.mulf %24, %23 : vector<8x64xf32>
      %cst_14 = arith.constant 4.471500e-02 : f32
      %26 = vector.broadcast %cst_14 : f32 to vector<8x64xf32>
      %27 = arith.mulf %26, %23 : vector<8x64xf32>
      %28 = arith.mulf %27, %23 : vector<8x64xf32>
      %29 = arith.mulf %28, %23 : vector<8x64xf32>
      %30 = arith.addf %23, %29 : vector<8x64xf32>
      %cst_15 = arith.constant 0.797884583 : f32
      %31 = vector.broadcast %cst_15 : f32 to vector<8x64xf32>
      %32 = arith.mulf %31, %30 : vector<8x64xf32>
      %33 = math.tanh %32 : vector<8x64xf32>
      %cst_16 = arith.constant 1.000000e+00 : f32
      %34 = vector.broadcast %cst_16 : f32 to vector<8x64xf32>
      %35 = arith.addf %34, %33 : vector<8x64xf32>
      %36 = arith.mulf %25, %35 : vector<8x64xf32>
      %37 = vector.extract_strided_slice %20 {offsets = [0, 64], sizes = [8, 64], strides = [1, 1]} : vector<8x128xf32> to vector<8x64xf32>
      %38 = arith.mulf %36, %37 : vector<8x64xf32>
      %39 = vector.broadcast %22 : vector<8x1xf32> to vector<8x64xf32>
      %40 = arith.mulf %39, %38 : vector<8x64xf32>
      %c0_17 = arith.constant 0 : index
      %c0_18 = arith.constant 0 : index
      %41 = vector.load %arg10[%c0_17, %c0_18] : memref<8x32xf32, #tpu.memory_space<vmem>>, vector<8x32xf32>
      %c0_19 = arith.constant 0 : index
      %c0_20 = arith.constant 0 : index
      %c0_21 = arith.constant 0 : index
      %42 = vector.load %arg7[%c0_19, %c0_20, %c0_21] : memref<1x64x32xf32, #tpu.memory_space<vmem>>, vector<1x64x32xf32>
      %43 = vector.shape_cast %42 : vector<1x64x32xf32> to vector<64x32xf32>
      %cst_22 = arith.constant dense<0.000000e+00> : vector<8x32xf32>
      %44 = tpu.matmul %40, %43, %cst_22 {dimension_numbers = #tpu.dot_dimension_numbers<[1], [0], [0], [1], [0, 0, 1, 1], [], []>} : vector<8x64xf32>, vector<64x32xf32>, vector<8x32xf32> -> vector<8x32xf32>
      %45 = arith.addf %41, %44 : vector<8x32xf32>
      %c0_23 = arith.constant 0 : index
      %c0_24 = arith.constant 0 : index
      %46 = vector.load %arg10[%c0_23, %c0_24] : memref<8x32xf32, #tpu.memory_space<vmem>>, vector<8x32xf32>
      tpu.vector_store %arg10[%c0_23, %c0_24], %45 {strides = array<i32>} : memref<8x32xf32, #tpu.memory_space<vmem>>, vector<8x32xf32>,
    } else {
    }
    %c3_i32 = arith.constant 3 : i32
    %12 = arith.cmpi eq, %arg1, %c3_i32 : i32
    %c0_i32_4 = arith.constant 0 : i32
    %13 = arith.cmpi eq, %arg2, %c0_i32_4 : i32
    %14 = arith.andi %12, %13 : i1
    %15 = arith.extui %14 : i1 to i32
    %c0_i32_5 = arith.constant 0 : i32
    %16 = arith.cmpi ne, %15, %c0_i32_5 : i32
    scf.if %16 {
      %c0 = arith.constant 0 : index
      %c0_6 = arith.constant 0 : index
      %17 = vector.load %arg10[%c0, %c0_6] : memref<8x32xf32, #tpu.memory_space<vmem>>, vector<8x32xf32>
      %c0_7 = arith.constant 0 : index
      %c0_8 = arith.constant 0 : index
      %18 = vector.load %arg9[%c0_7, %c0_8] : memref<8x32xf32, #tpu.memory_space<vmem>>, vector<8x32xf32>
      tpu.vector_store %arg9[%c0_7, %c0_8], %17 {strides = array<i32>} : memref<8x32xf32, #tpu.memory_space<vmem>>, vector<8x32xf32>,
    } else {
    }
    return
  }
  func.func @transform_0(%arg0: i32, %arg1: i32, %arg2: i32, %arg3: memref<8xi32, #tpu.memory_space<smem>>, %arg4: memref<8xi32, #tpu.memory_space<smem>>) -> (i32, i32) {
    %c0_i32 = arith.constant 0 : i32
    %c0_i32_0 = arith.constant 0 : i32
    return %arg0, %c0_i32 : i32, i32
  }
  func.func @transform_1(%arg0: i32, %arg1: i32, %arg2: i32, %arg3: memref<8xi32, #tpu.memory_space<smem>>, %arg4: memref<8xi32, #tpu.memory_space<smem>>) -> (i32, i32, i32) {
    %c4_i32 = arith.constant 4 : i32
    %0 = arith.muli %arg0, %c4_i32 : i32
    %1 = arith.addi %0, %arg1 : i32
    %2 = arith.index_cast %1 : i32 to index
    %3 = memref.load %arg3[%2] : memref<8xi32, #tpu.memory_space<smem>>
    %c4_i32_0 = arith.constant 4 : i32
    %4 = arith.muli %arg0, %c4_i32_0 : i32
    %5 = arith.addi %4, %arg1 : i32
    %6 = arith.index_cast %5 : i32 to index
    %7 = memref.load %arg4[%6] : memref<8xi32, #tpu.memory_space<smem>>
    %8 = arith.muli %3, %arg2 : i32
    %c1_i32 = arith.constant 1 : i32
    %9 = arith.subi %c1_i32, %3 : i32
    %c0_i32 = arith.constant 0 : i32
    %10 = arith.muli %9, %c0_i32 : i32
    %11 = arith.addi %8, %10 : i32
    %c0_i32_1 = arith.constant 0 : i32
    %c0_i32_2 = arith.constant 0 : i32
    return %7, %c0_i32_1, %11 : i32, i32, i32
  }
  func.func @transform_2(%arg0: i32, %arg1: i32, %arg2: i32, %arg3: memref<8xi32, #tpu.memory_space<smem>>, %arg4: memref<8xi32, #tpu.memory_space<smem>>) -> (i32, i32, i32) {
    %c4_i32 = arith.constant 4 : i32
    %0 = arith.muli %arg0, %c4_i32 : i32
    %1 = arith.addi %0, %arg1 : i32
    %2 = arith.index_cast %1 : i32 to index
    %3 = memref.load %arg3[%2] : memref<8xi32, #tpu.memory_space<smem>>
    %c4_i32_0 = arith.constant 4 : i32
    %4 = arith.muli %arg0, %c4_i32_0 : i32
    %5 = arith.addi %4, %arg1 : i32
    %6 = arith.index_cast %5 : i32 to index
    %7 = memref.load %arg4[%6] : memref<8xi32, #tpu.memory_space<smem>>
    %8 = arith.muli %3, %arg2 : i32
    %c1_i32 = arith.constant 1 : i32
    %9 = arith.subi %c1_i32, %3 : i32
    %c0_i32 = arith.constant 0 : i32
    %10 = arith.muli %9, %c0_i32 : i32
    %11 = arith.addi %8, %10 : i32
    %c0_i32_1 = arith.constant 0 : i32
    %c0_i32_2 = arith.constant 0 : i32
    return %7, %11, %c0_i32_1 : i32, i32, i32
  }
  func.func @transform_3(%arg0: i32, %arg1: i32, %arg2: i32, %arg3: memref<8xi32, #tpu.memory_space<smem>>, %arg4: memref<8xi32, #tpu.memory_space<smem>>) -> (i32, i32, i32) {
    %c4_i32 = arith.constant 4 : i32
    %0 = arith.muli %arg0, %c4_i32 : i32
    %1 = arith.addi %0, %arg1 : i32
    %2 = arith.index_cast %1 : i32 to index
    %3 = memref.load %arg4[%2] : memref<8xi32, #tpu.memory_space<smem>>
    %c0_i32 = arith.constant 0 : i32
    %c0_i32_0 = arith.constant 0 : i32
    return %3, %arg0, %c0_i32 : i32, i32, i32
  }
  func.func @transform_4(%arg0: i32, %arg1: i32, %arg2: i32, %arg3: memref<8xi32, #tpu.memory_space<smem>>, %arg4: memref<8xi32, #tpu.memory_space<smem>>) -> (i32, i32) {
    %c0_i32 = arith.constant 0 : i32
    %c0_i32_0 = arith.constant 0 : i32
    return %arg0, %c0_i32 : i32, i32
  }
}

</mosaic_0001>

<llo_original>
// kernel: gemmoe_sparse_moe_block.1
$region0: #{gemmoe_sparse_moe_block.1}
  #allocation0 [shape = 'u32[]', space=smem, size = 0x4, offset = 0x4, fixed_abs, tag = 'smem constant byte address 0x4 - core index']
  #allocation1 [shape = 'u32[72,128]{1,0:T(1,128)}', space=vmem, size = 0x9000, scoped, tag = 'internal scratch']
  #allocation2 [shape = 'f32[8,32]{1,0:T(8,128)}', space=vmem, size = 0x1000, scoped, tag = 'scratch operand']
  #allocation3 [shape = 's32[1]{0}', space=sflag, size = 0x4, scoped, tag = 'scoped memory for gemmoe_sparse_moe_block.1']
  #allocation4 [shape = 'u8[512]{0}', space=smem, size = 0x200, scoped, tag = 'prefetched SMEM operand 0']
  #allocation5 [shape = 'u8[512]{0}', space=smem, size = 0x200, scoped, tag = 'prefetched SMEM operand 1']
  %s0 = inlined_call_operand.vmem [shape: s32[8], index: 0, kind: input, shape index: {}]
  %s1 = inlined_call_operand.vmem [shape: s32[8], index: 1, kind: input, shape index: {}]
  %s2 = inlined_call_operand.vmem [shape: f32[16,32], index: 2, kind: input, shape index: {}]
  %s3 = inlined_call_operand.vmem [shape: f32[4,32,128], index: 3, kind: input, shape index: {}]
  %s4 = inlined_call_operand.vmem [shape: f32[4,64,32], index: 4, kind: input, shape index: {}]
  %s5 = inlined_call_operand.vmem [shape: f32[4,16,1], index: 5, kind: input, shape index: {}]
  %s6 = inlined_call_operand.hbm [shape: f32[16,32], index: 6, kind: output, shape index: {}]
  %s7 = sld [smem:[#allocation0]]
  $region61: #{gemmoe_sparse_moe_block.1} parent=0
    _
  %s9 = ssub.s32 1, %s7
  %s10 = scalar_select 0, %s9, %s7
  %s12 = sshll.u32 %s0, 4
  %s13 = int_to_ptr.vmem [resolvable:$true] %s12
  %15 = dma.vmem_to_smem %s13, 16, [#allocation4], [#allocation3]
  %s17 = sshll.u32 %s1, 4
  %s18 = int_to_ptr.vmem [resolvable:$true] %s17
  %20 = dma.vmem_to_smem %s18, 16, [#allocation5], [#allocation3]
  %22 = dma.done [#allocation3], 32
  %23 = sfence
  $region1: #{gemmoe_sparse_moe_block.1} parent=0
    #allocation6 [shape = 'u8[8192]{0}', space=vmem, size = 0x2000, scoped, tag = 'output window, operand 0']
    #allocation7 [shape = 's32[2]{0}', space=sflag, size = 0x8, scoped, tag = 'scoped memory for gemmoe_sparse_moe_block.1']
    %24 = vsyncpa [#allocation7], 0
    %s25 = scalar_lea.sflag [#allocation7], 1
    %26 = vsyncpa %s25, 0
    loop: start=0, step=1, limit=10
    $region2: #{gemmoe_sparse_moe_block.1} parent=1 // loop_pre_header
      _
    $region3: #{gemmoe_sparse_moe_block.1} parent=1 // loop_header
      %s28 = sphi 0, %s32
      %p29 = scmp.ge.s32.totalorder %s28, 10
      %s35 = sphi 0, %s54
      %s36 = sphi 0, %s50
      %s37 = sphi 0, %s46
      %s38 = sphi 0, %s35
      %s39 = sphi 0, %s36
      %s40 = sphi 0, %s37
      %s41 = sphi 0, %s38
      %s42 = sphi 0, %s39
      %s43 = sphi 0, %s40
      %s57 = sphi 0, %s59
      %s60 = sphi 0, %s57
      %s61 = sphi 0, %s60
      %s77 = sphi 0, %s61
      %s95 = sphi 0, %s97
      %s98 = sphi 0, %s95
      %s99 = sphi 0, %s98
      %s115 = sphi 0, %s99
      %s133 = sphi 0, %s135
      %s136 = sphi 0, %s133
      %s137 = sphi 0, %s136
      %s153 = sphi 0, %s137
      %s167 = sphi 0, %s169
      %s170 = sphi 0, %s167
      %s171 = sphi 0, %s170
      %s187 = sphi 0, %s171
      %s193 = sphi 0, %s195
      %s196 = sphi 0, %s193
      %s197 = sphi 0, %s196
      %s213 = sphi 0, %s197
    $region4: #{gemmoe_sparse_moe_block.1} parent=1 // loop_header_branch
      %31 = sbr.rel (%p29) target = $region8
    $region5: #{gemmoe_sparse_moe_block.1} parent=1 // loop_body
      %s33 = ssub.s32 %s28, 1
      %s34 = ssub.s32 %s28, 2
      %s44 = sadd.s32 1, %s37
      %p45 = scmp.ge.s32.totalorder %s44, 1
      %s46 = scalar_select %p45, 0, %s44
      %s47 = sadd.s32 1, %s36
      %s48 = scalar_select %p45, %s47, %s36
      %p49 = scmp.ge.s32.totalorder %s48, 4
      %s50 = scalar_select %p49, 0, %s48
      %s51 = sadd.s32 1, %s35
      %s52 = scalar_select %p49, %s51, %s35
      %p53 = scmp.ge.s32.totalorder %s52, 2
      %s54 = scalar_select %p53, 0, %s52
      %s55 = ssub.s32 %s35, %s54
      %p56 = scmp.eq.s32.totalorder %s55, 0
      %s58 = sadd.s32 %s57, 1
      %s59 = scalar_select %p56, %s57, %s58
      %p62 = pneg %p56
      %p63 = scmp.eq.s32.totalorder %s28, 7
      %p64 = por %p62, %p63
      %p65 = scmp.ne.s32.totalorder %s57, %s60
      %p66 = scmp.eq.s32.totalorder %s28, 0
      %p67 = por %p65, %p66
      %p68 = scmp.ne.s32.totalorder %s57, %s60
      %p69 = scmp.eq.s32.totalorder %s33, 7
      %p70 = por %p68, %p69
      %p71 = scmp.ne.s32.totalorder %s60, %s61
      %p72 = scmp.eq.s32.totalorder %s33, 0
      %p73 = por %p71, %p72
      %p74 = scmp.ne.s32.totalorder %s60, %s61
      %p75 = scmp.eq.s32.totalorder %s34, 7
      %p76 = por %p74, %p75
      %p78 = scmp.ne.s32.totalorder %s61, %s77
      %p79 = scmp.eq.s32.totalorder %s34, 0
      %p80 = por %p78, %p79
      %s81 = smul.u32 %s35, 4
      %s82 = sadd.s32 %s81, %s36
      %s83 = sld [smem:[#allocation4 + %s82]]
      %s84 = sld [smem:[#allocation5 + %s82]]
      %s85 = smul.u32 %s83, %s37
      %s86 = smul.u32 %s54, 4
      %s87 = sadd.s32 %s86, %s50
      %s88 = sld [smem:[#allocation4 + %s87]]
      %s89 = sld [smem:[#allocation5 + %s87]]
      %s90 = smul.u32 %s88, %s46
      %s91 = ssub.s32 %s84, %s89
      %s92 = ssub.s32 %s85, %s90
      %s93 = sor.u32 %s91, %s92
      %p94 = scmp.eq.s32.totalorder %s93, 0
      %s96 = sadd.s32 %s95, 1
      %s97 = scalar_select %p94, %s95, %s96
      %p100 = pneg %p94
      %p101 = scmp.eq.s32.totalorder %s28, 7
      %p102 = por %p100, %p101
      %p103 = scmp.ne.s32.totalorder %s95, %s98
      %p104 = scmp.eq.s32.totalorder %s28, 0
      %p105 = por %p103, %p104
      %p106 = scmp.ne.s32.totalorder %s95, %s98
      %p107 = scmp.eq.s32.totalorder %s33, 7
      %p108 = por %p106, %p107
      %p109 = scmp.ne.s32.totalorder %s98, %s99
      %p110 = scmp.eq.s32.totalorder %s33, 0
      %p111 = por %p109, %p110
      %p112 = scmp.ne.s32.totalorder %s98, %s99
      %p113 = scmp.eq.s32.totalorder %s34, 7
      %p114 = por %p112, %p113
      %p116 = scmp.ne.s32.totalorder %s99, %s115
      %p117 = scmp.eq.s32.totalorder %s34, 0
      %p118 = por %p116, %p117
      %s119 = smul.u32 %s35, 4
      %s120 = sadd.s32 %s119, %s36
      %s121 = sld [smem:[#allocation4 + %s120]]
      %s122 = sld [smem:[#allocation5 + %s120]]
      %s123 = smul.u32 %s121, %s37
      %s124 = smul.u32 %s54, 4
      %s125 = sadd.s32 %s124, %s50
      %s126 = sld [smem:[#allocation4 + %s125]]
      %s127 = sld [smem:[#allocation5 + %s125]]
      %s128 = smul.u32 %s126, %s46
      %s129 = ssub.s32 %s122, %s127
      %s130 = ssub.s32 %s123, %s128
      %s131 = sor.u32 %s129, %s130
      %p132 = scmp.eq.s32.totalorder %s131, 0
      %s134 = sadd.s32 %s133, 1
      %s135 = scalar_select %p132, %s133, %s134
      %p138 = pneg %p132
      %p139 = scmp.eq.s32.totalorder %s28, 7
      %p140 = por %p138, %p139
      %p141 = scmp.ne.s32.totalorder %s133, %s136
      %p142 = scmp.eq.s32.totalorder %s28, 0
      %p143 = por %p141, %p142
      %p144 = scmp.ne.s32.totalorder %s133, %s136
      %p145 = scmp.eq.s32.totalorder %s33, 7
      %p146 = por %p144, %p145
      %p147 = scmp.ne.s32.totalorder %s136, %s137
      %p148 = scmp.eq.s32.totalorder %s33, 0
      %p149 = por %p147, %p148
      %p150 = scmp.ne.s32.totalorder %s136, %s137
      %p151 = scmp.eq.s32.totalorder %s34, 7
      %p152 = por %p150, %p151
      %p154 = scmp.ne.s32.totalorder %s137, %s153
      %p155 = scmp.eq.s32.totalorder %s34, 0
      %p156 = por %p154, %p155
      %s157 = smul.u32 %s35, 4
      %s158 = sadd.s32 %s157, %s36
      %s159 = sld [smem:[#allocation5 + %s158]]
      %s160 = smul.u32 %s54, 4
      %s161 = sadd.s32 %s160, %s50
      %s162 = sld [smem:[#allocation5 + %s161]]
      %s163 = ssub.s32 %s159, %s162
      %s164 = ssub.s32 %s35, %s54
      %s165 = sor.u32 %s163, %s164
      %p166 = scmp.eq.s32.totalorder %s165, 0
      %s168 = sadd.s32 %s167, 1
      %s169 = scalar_select %p166, %s167, %s168
      %p172 = pneg %p166
      %p173 = scmp.eq.s32.totalorder %s28, 7
      %p174 = por %p172, %p173
      %p175 = scmp.ne.s32.totalorder %s167, %s170
      %p176 = scmp.eq.s32.totalorder %s28, 0
      %p177 = por %p175, %p176
      %p178 = scmp.ne.s32.totalorder %s167, %s170
      %p179 = scmp.eq.s32.totalorder %s33, 7
      %p180 = por %p178, %p179
      %p181 = scmp.ne.s32.totalorder %s170, %s171
      %p182 = scmp.eq.s32.totalorder %s33, 0
      %p183 = por %p181, %p182
      %p184 = scmp.ne.s32.totalorder %s170, %s171
      %p185 = scmp.eq.s32.totalorder %s34, 7
      %p186 = por %p184, %p185
      %p188 = scmp.ne.s32.totalorder %s171, %s187
      %p189 = scmp.eq.s32.totalorder %s34, 0
      %p190 = por %p188, %p189
      %s191 = ssub.s32 %s35, %s54
      %p192 = scmp.eq.s32.totalorder %s191, 0
      %s194 = sadd.s32 %s193, 1
      %s195 = scalar_select %p192, %s193, %s194
      %p198 = pneg %p192
      %p199 = scmp.eq.s32.totalorder %s28, 7
      %p200 = por %p198, %p199
      %p201 = scmp.ne.s32.totalorder %s193, %s196
      %p202 = scmp.eq.s32.totalorder %s28, 0
      %p203 = por %p201, %p202
      %p204 = scmp.ne.s32.totalorder %s193, %s196
      %p205 = scmp.eq.s32.totalorder %s33, 7
      %p206 = por %p204, %p205
      %p207 = scmp.ne.s32.totalorder %s196, %s197
      %p208 = scmp.eq.s32.totalorder %s33, 0
      %p209 = por %p207, %p208
      %p210 = scmp.ne.s32.totalorder %s196, %s197
      %p211 = scmp.eq.s32.totalorder %s34, 7
      %p212 = por %p210, %p211
      %p214 = scmp.ne.s32.totalorder %s197, %s213
      %p215 = scmp.eq.s32.totalorder %s34, 0
      %p216 = por %p214, %p215
      %p217 = scmp.le.s32.totalorder 1, %s28
      %p218 = scmp.lt.s32.totalorder %s28, 9
      %p219 = pnand %p217, %p218
      %p220 = pneg %p219
      // Predicated region
      $region9: #{gemmoe_sparse_moe_block.1} parent=5 // pred_check
        _
      $region10: #{gemmoe_sparse_moe_block.1} parent=5 // pred_check_branch
        %222 = sbr.rel (%p219) target = $region12
      $region11: #{gemmoe_sparse_moe_block.1} parent=5 // pred_region
        %s223 = ssub.s32 %s28, 1
      $region12: #{gemmoe_sparse_moe_block.1} parent=5 // pred_fallthru
        _
      %p224 = scmp.lt.s32.totalorder %s28, 8
      // Predicated region
      $region13: #{gemmoe_sparse_moe_block.1} parent=5 // pred_check
        %p225 = pneg %p224
      $region14: #{gemmoe_sparse_moe_block.1} parent=5 // pred_check_branch
        %227 = sbr.rel (%p225) target = $region16
      $region15: #{gemmoe_sparse_moe_block.1} parent=5 // pred_region
        // Predicated region
        $region17: #{gemmoe_sparse_moe_block.1} parent=15 // pred_check
          %p228 = pneg %p67
        $region18: #{gemmoe_sparse_moe_block.1} parent=15 // pred_check_branch
          %230 = sbr.rel (%p228) target = $region20
        $region19: #{gemmoe_sparse_moe_block.1} parent=15 // pred_region
          %p231 = scmp.lt.s32.totalorder %s35, 1
          %s232 = scalar_select %p231, %s35, 1
          %s233 = smul.addr %s232, 8
          %s234 = scalar_lea.vmem %s2, %s233
        $region20: #{gemmoe_sparse_moe_block.1} parent=15 // pred_fallthru
          _
        // Predicated region
        $region21: #{gemmoe_sparse_moe_block.1} parent=15 // pred_check
          %p235 = pneg %p105
        $region22: #{gemmoe_sparse_moe_block.1} parent=15 // pred_check_branch
          %237 = sbr.rel (%p235) target = $region24
        $region23: #{gemmoe_sparse_moe_block.1} parent=15 // pred_region
          %s238 = smul.u32 %s35, 4
          %s239 = sadd.s32 %s238, %s36
          %s240 = sld [smem:[#allocation4 + %s239]]
          %s241 = sld [smem:[#allocation5 + %s239]]
          %s242 = smul.u32 %s240, %s37
          %p243 = scmp.lt.s32.totalorder %s241, 3
          %s244 = scalar_select %p243, %s241, 3
          %p245 = scmp.lt.s32.totalorder %s242, 0
          %s246 = scalar_select %p245, %s242, 0
          %s247 = smul.addr %s244, 4
          %s248 = sadd.s32 %s246, %s247
          %s249 = smul.addr %s248, 8
          %s250 = scalar_lea.vmem %s3, %s249
          %s251 = smul.u32 %s35, 4
          %s252 = sadd.s32 %s251, %s36
          %s253 = sld [smem:[#allocation4 + %s252]]
          %s254 = sld [smem:[#allocation5 + %s252]]
          %s255 = smul.u32 %s253, %s37
        $region24: #{gemmoe_sparse_moe_block.1} parent=15 // pred_fallthru
          _
        // Predicated region
        $region25: #{gemmoe_sparse_moe_block.1} parent=15 // pred_check
          %p256 = pneg %p143
        $region26: #{gemmoe_sparse_moe_block.1} parent=15 // pred_check_branch
          %258 = sbr.rel (%p256) target = $region28
        $region27: #{gemmoe_sparse_moe_block.1} parent=15 // pred_region
          %s259 = smul.u32 %s35, 4
          %s260 = sadd.s32 %s259, %s36
          %s261 = sld [smem:[#allocation4 + %s260]]
          %s262 = sld [smem:[#allocation5 + %s260]]
          %s263 = smul.u32 %s261, %s37
          %s264 = smul.u32 8, %s263
          %p265 = scmp.lt.s32.totalorder %s262, 3
          %s266 = scalar_select %p265, %s262, 3
          %p267 = scmp.lt.s32.totalorder %s264, 7
          %s268 = scalar_select %p267, %s264, 7
          %s269 = smul.addr %s266, 8
          %s270 = sadd.s32 %s268, %s269
          %s271 = smul.addr %s270, 8
          %s272 = scalar_lea.vmem %s4, %s271
          %s273 = smul.u32 %s35, 4
          %s274 = sadd.s32 %s273, %s36
          %s275 = sld [smem:[#allocation4 + %s274]]
          %s276 = sld [smem:[#allocation5 + %s274]]
          %s277 = smul.u32 %s275, %s37
          %s278 = smul.u32 8, %s277
        $region28: #{gemmoe_sparse_moe_block.1} parent=15 // pred_fallthru
          _
        // Predicated region
        $region29: #{gemmoe_sparse_moe_block.1} parent=15 // pred_check
          %p279 = pneg %p177
        $region30: #{gemmoe_sparse_moe_block.1} parent=15 // pred_check_branch
          %281 = sbr.rel (%p279) target = $region32
        $region31: #{gemmoe_sparse_moe_block.1} parent=15 // pred_region
          %s282 = smul.u32 %s35, 4
          %s283 = sadd.s32 %s282, %s36
          %s284 = sld [smem:[#allocation5 + %s283]]
          %p285 = scmp.lt.s32.totalorder %s284, 3
          %s286 = scalar_select %p285, %s284, 3
          %p287 = scmp.lt.s32.totalorder %s35, 1
          %s288 = scalar_select %p287, %s35, 1
          %s289 = smul.addr %s286, 2
          %s290 = sadd.s32 %s288, %s289
          %s291 = smul.addr %s290, 8
          %s292 = scalar_lea.vmem %s5, %s291
          %s293 = smul.u32 %s35, 4
          %s294 = sadd.s32 %s293, %s36
          %s295 = sld [smem:[#allocation5 + %s294]]
        $region32: #{gemmoe_sparse_moe_block.1} parent=15 // pred_fallthru
          _
      $region16: #{gemmoe_sparse_moe_block.1} parent=5 // pred_fallthru
        _
      %p296 = scmp.le.s32.totalorder 1, %s28
      %p297 = scmp.lt.s32.totalorder %s28, 9
      %p298 = pnand %p296, %p297
      %p299 = pneg %p298
      // Predicated region
      $region33: #{gemmoe_sparse_moe_block.1} parent=5 // pred_check
        _
      $region34: #{gemmoe_sparse_moe_block.1} parent=5 // pred_check_branch
        %301 = sbr.rel (%p298) target = $region36
      $region35: #{gemmoe_sparse_moe_block.1} parent=5 // pred_region
        %s302 = ssub.s32 %s28, 1
        %p303 = scmp.lt.s32.totalorder %s38, 1
        %s304 = scalar_select %p303, %s38, 1
        %s305 = smul.addr %s304, 8
        %s306 = scalar_lea.vmem %s2, %s305
        %p307 = pneg %p73
        %p308 = pneg %p70
        %s309 = smul.u32 %s38, 4
        %s310 = sadd.s32 %s309, %s39
        %s311 = sld [smem:[#allocation4 + %s310]]
        %s312 = sld [smem:[#allocation5 + %s310]]
        %s313 = smul.u32 %s311, %s40
        %p314 = scmp.lt.s32.totalorder %s312, 3
        %s315 = scalar_select %p314, %s312, 3
        %p316 = scmp.lt.s32.totalorder %s313, 0
        %s317 = scalar_select %p316, %s313, 0
        %s318 = smul.addr %s315, 4
        %s319 = sadd.s32 %s317, %s318
        %s320 = smul.addr %s319, 8
        %s321 = scalar_lea.vmem %s3, %s320
        %p322 = pneg %p111
        %p323 = pneg %p108
        %s324 = smul.u32 %s38, 4
        %s325 = sadd.s32 %s324, %s39
        %s326 = sld [smem:[#allocation4 + %s325]]
        %s327 = sld [smem:[#allocation5 + %s325]]
        %s328 = smul.u32 %s326, %s40
        %s329 = smul.u32 8, %s328
        %p330 = scmp.lt.s32.totalorder %s327, 3
        %s331 = scalar_select %p330, %s327, 3
        %p332 = scmp.lt.s32.totalorder %s329, 7
        %s333 = scalar_select %p332, %s329, 7
        %s334 = smul.addr %s331, 8
        %s335 = sadd.s32 %s333, %s334
        %s336 = smul.addr %s335, 8
        %s337 = scalar_lea.vmem %s4, %s336
        %p338 = pneg %p149
        %p339 = pneg %p146
        %s340 = smul.u32 %s38, 4
        %s341 = sadd.s32 %s340, %s39
        %s342 = sld [smem:[#allocation5 + %s341]]
        %p343 = scmp.lt.s32.totalorder %s342, 3
        %s344 = scalar_select %p343, %s342, 3
        %p345 = scmp.lt.s32.totalorder %s38, 1
        %s346 = scalar_select %p345, %s38, 1
        %s347 = smul.addr %s344, 2
        %s348 = sadd.s32 %s346, %s347
        %s349 = smul.addr %s348, 8
        %s350 = scalar_lea.vmem %s5, %s349
        %p351 = pneg %p183
        %p352 = pneg %p180
        %p353 = pneg %p209
        %p354 = pneg %p206
        %s355 = sand.u32 %s196, 1
        %s356 = scalar_lea.sflag [#allocation7], %s355
        %s357 = sand.u32 %s196, 1
        %s358 = smul.addr %s357, 8
        %s359 = scalar_lea.vmem [#allocation6], %s358
        %p360 = scmp.lt.s32.totalorder %s38, 1
        %s361 = scalar_select %p360, %s38, 1
        %s362 = smul.addr %s361, 8
        %s363 = scalar_lea.vmem %s2, %s362
        %s364 = smul.u32 %s38, 4
        %s365 = sadd.s32 %s364, %s39
        %s366 = sld [smem:[#allocation4 + %s365]]
        %s367 = sld [smem:[#allocation5 + %s365]]
        %s368 = smul.u32 %s366, %s40
        %p369 = scmp.lt.s32.totalorder %s367, 3
        %s370 = scalar_select %p369, %s367, 3
        %p371 = scmp.lt.s32.totalorder %s368, 0
        %s372 = scalar_select %p371, %s368, 0
        %s373 = smul.addr %s370, 4
        %s374 = sadd.s32 %s372, %s373
        %s375 = smul.addr %s374, 8
        %s376 = scalar_lea.vmem %s3, %s375
        %s377 = smul.u32 %s38, 4
        %s378 = sadd.s32 %s377, %s39
        %s379 = sld [smem:[#allocation4 + %s378]]
        %s380 = sld [smem:[#allocation5 + %s378]]
        %s381 = smul.u32 %s379, %s40
        %s382 = smul.u32 %s38, 4
        %s383 = sadd.s32 %s382, %s39
        %s384 = sld [smem:[#allocation4 + %s383]]
        %s385 = sld [smem:[#allocation5 + %s383]]
        %s386 = smul.u32 %s384, %s40
        %s387 = smul.u32 8, %s386
        %p388 = scmp.lt.s32.totalorder %s385, 3
        %s389 = scalar_select %p388, %s385, 3
        %p390 = scmp.lt.s32.totalorder %s387, 7
        %s391 = scalar_select %p390, %s387, 7
        %s392 = smul.addr %s389, 8
        %s393 = sadd.s32 %s391, %s392
        %s394 = smul.addr %s393, 8
        %s395 = scalar_lea.vmem %s4, %s394
        %s396 = smul.u32 %s38, 4
        %s397 = sadd.s32 %s396, %s39
        %s398 = sld [smem:[#allocation4 + %s397]]
        %s399 = sld [smem:[#allocation5 + %s397]]
        %s400 = smul.u32 %s398, %s40
        %s401 = smul.u32 8, %s400
        %s402 = smul.u32 %s38, 4
        %s403 = sadd.s32 %s402, %s39
        %s404 = sld [smem:[#allocation5 + %s403]]
        %p405 = scmp.lt.s32.totalorder %s404, 3
        %s406 = scalar_select %p405, %s404, 3
        %p407 = scmp.lt.s32.totalorder %s38, 1
        %s408 = scalar_select %p407, %s38, 1
        %s409 = smul.addr %s406, 2
        %s410 = sadd.s32 %s408, %s409
        %s411 = smul.addr %s410, 8
        %s412 = scalar_lea.vmem %s5, %s411
        %s413 = smul.u32 %s38, 4
        %s414 = sadd.s32 %s413, %s39
        %s415 = sld [smem:[#allocation5 + %s414]]
        %p416 = scmp.eq.s32.totalorder %s39, 0
        %p417 = scmp.eq.s32.totalorder %s40, 0
        %p418 = pnand %p416, %p417
        %p419 = pneg %p418
        // Predicated region
        $region37: #{gemmoe_sparse_moe_block.1} parent=35 // pred_check
          _
        $region38: #{gemmoe_sparse_moe_block.1} parent=35 // pred_check_branch
          %421 = sbr.rel (%p418) target = $region40
        $region39: #{gemmoe_sparse_moe_block.1} parent=35 // pred_region
          %vm422 = vcmask 261120
          %423 = vst.msk [vmem:[#allocation2] sm:$0xff] %vm422, 0.0
        $region40: #{gemmoe_sparse_moe_block.1} parent=35 // pred_fallthru
          _
        %s424 = smul.u32 %s38, 4
        %s425 = sadd.s32 %s424, %s39
        %s426 = sld [smem:[#allocation4 + %s425]]
        %p427 = scmp.ne.s32.totalorder %s426, 0
        // Predicated region
        $region41: #{gemmoe_sparse_moe_block.1} parent=35 // pred_check
          %p428 = pneg %p427
        $region42: #{gemmoe_sparse_moe_block.1} parent=35 // pred_check_branch
          %430 = sbr.rel (%p428) target = $region44
        $region43: #{gemmoe_sparse_moe_block.1} parent=35 // pred_region
          %v431 = vld [vmem:[%s363] sm:$0xff]
          %v432 = vld [vmem:[%s376] sm:$0xff]
          %v433 = vld [vmem:[%s376 + $0x8] sm:$0xff]
          %v434 = vld [vmem:[%s376 + $0x10] sm:$0xff]
          %v435 = vld [vmem:[%s376 + $0x18] sm:$0xff]
          %vm436 = vcmask 261120
          %v438 = vsel %vm436, %v431, 0
          %440 = vmatpush.msra.mxu0 0.0
          %441 = vmatpush.msra.mxu0 0.0
          %442 = vmatpush.msra.mxu0 0.0
          %443 = vmatpush.msra.mxu0 0.0
          %444 = vmatpush.msra.mxu0 0.0
          %445 = vmatpush.msra.mxu0 0.0
          %446 = vmatpush.msra.mxu0 0.0
          %447 = vmatpush.msra.mxu0 0.0
          %448 = vmatpush.msra.mxu0 0.0
          %449 = vmatpush.msra.mxu0 0.0
          %450 = vmatpush.msra.mxu0 0.0
          %451 = vmatpush.msra.mxu0 0.0
          %452 = vmatpush.msra.mxu0 %v435
          %453 = vmatpush.msra.mxu0 %v434
          %454 = vmatpush.msra.mxu0 %v433
          %455 = vmatpush.msra.mxu0 %v432
          %456 = vmatmul.f32.gmra.mxu0 %v438
          %v457 = vpop.f32.mrf.mxu0
          %v458 = vadd.f32 0.0, %v457
          %459 = vdwg.mxu0
          %v460 = vld [vmem:[%s412] sm:$0xff]
          %v461 = vmul.f32 %v458, 0.5
          %v462 = vmul.f32 %v458, 0.044715
          %v463 = vmul.f32 %v462, %v458
          %v464 = vmul.f32 %v463, %v458
          %v465 = vadd.f32 %v458, %v464
          %v466 = vmul.f32 %v465, 0.7978846
          %v467 = vtanh.pop %v466
          %v468 = vadd.f32 %v467, 1.0
          %v469 = vmul.f32 %v461, %v468
          %471 = vrot.lane.b32.xlu0 %v458, 64
          %v472 = vpop.permute.xlu0 %471
          %v474 = vmul.f32 %v469, %v472
          %476 = vset.pattern.permute.xlu0 0
          %477 = vperm.xlu0 %476, %v460
          %v478 = vpop.permute.xlu0 %477
          %v480 = vmul.f32 %v478, %v474
          %v481 = vld [vmem:[#allocation2] sm:$0xff]
          %v482 = vld [vmem:[%s395] sm:$0xff]
          %v483 = vld [vmem:[%s395 + $0x8] sm:$0xff]
          %v484 = vld [vmem:[%s395 + $0x10] sm:$0xff]
          %v485 = vld [vmem:[%s395 + $0x18] sm:$0xff]
          %v486 = vld [vmem:[%s395 + $0x20] sm:$0xff]
          %v487 = vld [vmem:[%s395 + $0x28] sm:$0xff]
          %v488 = vld [vmem:[%s395 + $0x30] sm:$0xff]
          %v489 = vld [vmem:[%s395 + $0x38] sm:$0xff]
          %vm490 = vcmask 523264
          %v492 = vsel %vm490, %v480, 0
          %494 = vmatpush.msra.mxu0 0.0
          %495 = vmatpush.msra.mxu0 0.0
          %496 = vmatpush.msra.mxu0 0.0
          %497 = vmatpush.msra.mxu0 0.0
          %498 = vmatpush.msra.mxu0 0.0
          %499 = vmatpush.msra.mxu0 0.0
          %500 = vmatpush.msra.mxu0 0.0
          %501 = vmatpush.msra.mxu0 0.0
          %502 = vmatpush.msra.mxu0 %v489
          %503 = vmatpush.msra.mxu0 %v488
          %504 = vmatpush.msra.mxu0 %v487
          %505 = vmatpush.msra.mxu0 %v486
          %506 = vmatpush.msra.mxu0 %v485
          %507 = vmatpush.msra.mxu0 %v484
          %508 = vmatpush.msra.mxu0 %v483
          %509 = vmatpush.msra.mxu0 %v482
          %510 = vmatmul.f32.gmra.mxu0 %v492
          %v511 = vpop.f32.mrf.mxu0
          %v512 = vadd.f32 0.0, %v511
          %513 = vdwg.mxu0
          %v514 = vadd.f32 %v481, %v512
          %515 = vst.msk [vmem:[#allocation2] sm:$0xff] %vm436, %v514
        $region44: #{gemmoe_sparse_moe_block.1} parent=35 // pred_fallthru
          _
        %p516 = scmp.eq.s32.totalorder %s39, 3
        %p517 = pnand %p516, %p417
        %p518 = pneg %p517
        // Predicated region
        $region45: #{gemmoe_sparse_moe_block.1} parent=35 // pred_check
          _
        $region46: #{gemmoe_sparse_moe_block.1} parent=35 // pred_check_branch
          %520 = sbr.rel (%p517) target = $region48
        $region47: #{gemmoe_sparse_moe_block.1} parent=35 // pred_region
          %v521 = vld [vmem:[#allocation2] sm:$0xff]
          %vm522 = vcmask 261120
          %523 = vst.msk [vmem:[%s359] sm:$0xff] %vm522, %v521
        $region48: #{gemmoe_sparse_moe_block.1} parent=35 // pred_fallthru
          _
        %s524 = sand.u32 %s196, 1
        %s525 = scalar_lea.sflag [#allocation7], %s524
        %s526 = sand.u32 %s196, 1
        %s527 = smul.addr %s526, 8
        %s528 = scalar_lea.vmem [#allocation6], %s527
        // Predicated region
        $region49: #{gemmoe_sparse_moe_block.1} parent=35 // pred_check
          %p529 = pneg %p206
        $region50: #{gemmoe_sparse_moe_block.1} parent=35 // pred_check_branch
          %531 = sbr.rel (%p529) target = $region52
        $region51: #{gemmoe_sparse_moe_block.1} parent=35 // pred_region
          %533 = vsyncadd %s525, 0
          %s534 = smul.addr %s38, 8
          %s535 = scalar_lea.hbm %s6, %s534
          %s537 = sshll.u32 %s528, 4
          %s538 = int_to_ptr.vmem [resolvable:$true] %s537
          %s539 = sshll.u32 %s535, 4
          %s540 = int_to_ptr.hbm [resolvable:$true] %s539
          %542 = dma.vmem_to_hbm [thread:$0]  %s538, 128, %s540, %s525
        $region52: #{gemmoe_sparse_moe_block.1} parent=35 // pred_fallthru
          _
      $region36: #{gemmoe_sparse_moe_block.1} parent=5 // pred_fallthru
        _
      %p543 = scmp.le.s32.totalorder 2, %s28
      // Predicated region
      $region53: #{gemmoe_sparse_moe_block.1} parent=5 // pred_check
        %p544 = pneg %p543
      $region54: #{gemmoe_sparse_moe_block.1} parent=5 // pred_check_branch
        %546 = sbr.rel (%p544) target = $region56
      $region55: #{gemmoe_sparse_moe_block.1} parent=5 // pred_region
        %s547 = ssub.s32 %s28, 2
        // Predicated region
        $region57: #{gemmoe_sparse_moe_block.1} parent=55 // pred_check
          %p548 = pneg %p212
        $region58: #{gemmoe_sparse_moe_block.1} parent=55 // pred_check_branch
          %550 = sbr.rel (%p548) target = $region60
        $region59: #{gemmoe_sparse_moe_block.1} parent=55 // pred_region
          %s551 = sand.u32 %s197, 1
          %s552 = scalar_lea.sflag [#allocation7], %s551
          %s553 = sand.u32 %s197, 1
          %s554 = smul.addr %s553, 8
          %s555 = scalar_lea.vmem [#allocation6], %s554
          %557 = dma.done %s552, 128
        $region60: #{gemmoe_sparse_moe_block.1} parent=55 // pred_fallthru
          _
      $region56: #{gemmoe_sparse_moe_block.1} parent=5 // pred_fallthru
        _
    $region6: #{gemmoe_sparse_moe_block.1} parent=1 // loop_footer
      %s32 = sadd.s32 1, %s28
    $region7: #{gemmoe_sparse_moe_block.1} parent=1 // loop_footer_branch
      %27 = sbr.rel target = $region3
    $region8: #{gemmoe_sparse_moe_block.1} parent=1 // loop_exit
      _
    %558 = vsyncpa [#allocation7], 1
    %s559 = scalar_lea.sflag [#allocation7], 1
    %560 = vsyncpa %s559, 1

</llo_original>
